<compile_context>
chip_gen: v6e
topology: v6e:2x2x1
jax: 0.10.0
libtpu: 0.0.40
codegen_flags: <defaults>
</compile_context>

<pallas_src>
import functools

import jax
import jax.numpy as jnp
from jax.experimental import pallas as pl
from jax.experimental.pallas import tpu as pltpu


# ----------------------------------------------------------------------------
# Fused kernel: Conv3d(k=3, pad=1) taps -> tanh/sigmoid gates -> QRNN update.
# ----------------------------------------------------------------------------
def _fused_qrnn_kernel(x0_ref, x1_ref, x2_ref, w_ref, b_ref, m_ref,
                       o_ref, h_ref, *, hid, H, W):
    """One (n, t) grid step.

    x{0,1,2}_ref : (C, Lxp)  bf16 padded time slabs t-1, t, t+1.  Flattened
                   plane layout: [1 left-pad, (H+2) zero-padded rows of width W,
                   1 slack element].
    w_ref        : (2*hid, 27*C) bf16 conv weight, columns ordered (kh, kw, kt, c)
    b_ref        : (2*hid, 1)    f32 bias
    m_ref        : (2, H*W)      bf16 edge-column masks for kw=0 / kw=2 taps
    o_ref        : (hid, H*W)    f32 hidden state h_t (lane-dense, halo-free)
    h_ref        : (hid, H*W)    f32 VMEM carry of h_{t-1}
    """
    HW = H * W
    t = pl.program_id(1)

    @pl.when(t == 0)
    def _():
        h_ref[...] = jnp.zeros_like(h_ref)

    # Stack the three time slabs along channels: (3*C, Lxp).
    xcat = jnp.concatenate([x0_ref[...], x1_ref[...], x2_ref[...]], axis=0)

    m_left = m_ref[0:1, :]    # zeros where out col == 0     (kw = 0 taps)
    m_right = m_ref[1:2, :]   # zeros where out col == W - 1 (kw = 2 taps)

    # Fold all 27 taps into the MXU contraction dim: one lane-shifted (and
    # edge-masked) copy of xcat per (kh, kw) tap -> (27*C, H*W).  The lane
    # shift on the flattened plane wraps across rows exactly where the conv
    # should have read zero width-padding, hence the kw=0 / kw=2 masks.
    pieces = []
    for kh in range(3):
        for kw in range(3):
            off = kh * W + kw
            p = xcat[:, off:off + HW]
            if kw == 0:
                p = p * m_left
            elif kw == 2:
                p = p * m_right
            pieces.append(p)
    xstack = jnp.concatenate(pieces, axis=0)          # (27*C, HW) bf16

    # Single MXU contraction (K = 27*C), f32 accumulation, bias in epilogue.
    # TODO(synk): for production planes (L >> 512 lanes) tile HW inside the
    # kernel to keep the live accumulator to ~16-24 vregs.
    acc = jnp.dot(w_ref[...], xstack, preferred_element_type=jnp.float32)
    acc = acc + b_ref[...]                            # (2*hid, HW) f32

    # Gate activations (EUP) + QRNN recurrence (VPU), all f32.
    # hid is expected to be a multiple of 8 so the split lands on vreg rows.
    z = jnp.tanh(acc[:hid])
    f = jax.nn.sigmoid(acc[hid:])
    h = z + f * (h_ref[...] - z)                      # == f*h_prev + (1-f)*z
    h_ref[...] = h
    o_ref[...] = h


# ----------------------------------------------------------------------------
# Wrapper: layout glue in plain JAX, hot path in the fused Pallas kernel.
# ----------------------------------------------------------------------------
@functools.partial(jax.jit, static_argnames=("reverse",))
def qrnn3d_layer_forward(x, w, b, reverse=False):
    """x: (N, C, T, H, W) f32; w: (2*hid, C, 3, 3, 3); b: (2*hid,).

    Returns (N, hid, T, H, W) f32, matching QRNN3DLayer.forward."""
    N, C, T, H, W = x.shape
    two_hid = w.shape[0]
    hid = two_hid // 2
    HW = H * W
    Lxp = (H + 2) * W + 2     # [1 left pad, (H+2) rows * W, 1 slack element]

    # Input -> (N, T+2, C, Lxp) bf16 slabs: zero-pad time and height, flatten
    # the (H+2, W) plane, then add the 1-element left pad / right slack so the
    # per-tap lane shift (kh*W + kw) stays in range.
    xp = jnp.pad(x, ((0, 0), (0, 0), (1, 1), (1, 1), (0, 0)))
    xt = jnp.transpose(xp, (0, 2, 1, 3, 4)).reshape(N, T + 2, C, (H + 2) * W)
    xt = jnp.pad(xt, ((0, 0), (0, 0), (0, 0), (1, 1))).astype(jnp.bfloat16)

    # Conv weight -> (2*hid, 27*C), column order (kh, kw, kt, c) to match the
    # stacked operand built in-kernel; bias -> (2*hid, 1) f32.
    wt = jnp.transpose(w, (0, 3, 4, 2, 1)).reshape(two_hid, 27 * C)
    wt = wt.astype(jnp.bfloat16)
    bias = b.reshape(two_hid, 1).astype(jnp.float32)

    # Edge-column masks (exactly 0/1 in bf16) for the kw=0 / kw=2 taps.
    col = jnp.arange(HW, dtype=jnp.int32) % W
    masks = jnp.stack([col != 0, col != (W - 1)]).astype(jnp.bfloat16)  # (2, HW)

    if reverse:
        tmap = lambda t: T - 1 - t
    else:
        tmap = lambda t: t

    def x_spec(kt):
        return pl.BlockSpec((None, None, C, Lxp),
                            lambda n, t, kt=kt: (n, tmap(t) + kt, 0, 0))

    kernel = functools.partial(_fused_qrnn_kernel, hid=hid, H=H, W=W)

    # TODO(synk): for large N, block several batch items per grid step (bigger
    # HBM transactions); for stacked layers (C ~ hid), switch the three x inputs
    # to a manual rolling 3-slot VMEM buffer to avoid re-reading each slab 3x,
    # and re-budget vmem_limit_bytes on v7x (64 MiB physical VMEM).
    h = pl.pallas_call(
        kernel,
        out_shape=jax.ShapeDtypeStruct((N, T, hid, HW), jnp.float32),
        grid=(N, T),
        in_specs=[x_spec(0), x_spec(1), x_spec(2),
                  pl.BlockSpec((two_hid, 27 * C), lambda n, t: (0, 0)),
                  pl.BlockSpec((two_hid, 1), lambda n, t: (0, 0)),
                  pl.BlockSpec((2, HW), lambda n, t: (0, 0))],
        out_specs=pl.BlockSpec((None, None, hid, HW),
                               lambda n, t: (n, tmap(t), 0, 0)),
        scratch_shapes=[pltpu.VMEM((hid, HW), jnp.float32)],
        compiler_params=pltpu.CompilerParams(
            dimension_semantics=("parallel", "arbitrary")),
    )(xt, xt, xt, wt, bias, masks)

    # TODO(synk): for stacked QRNN layers keep the (N, T, hid, H*W) layout
    # between layers and transpose only once at the network boundary.
    return jnp.transpose(h.reshape(N, T, hid, H, W), (0, 2, 1, 3, 4))


# ----------------------------------------------------------------------------
# Pure-JAX reference for verification
# ----------------------------------------------------------------------------
def _reference_forward(x, w, b, reverse=False):
    hid = w.shape[0] // 2
    gates = jax.lax.conv_general_dilated(
        x, w, window_strides=(1, 1, 1),
        padding=((1, 1), (1, 1), (1, 1)),
        dimension_numbers=("NCDHW", "OIDHW", "NCDHW"),
        precision=jax.lax.Precision.HIGHEST,
    ) + b[None, :, None, None, None]
    Z = jnp.tanh(gates[:, :hid])
    F = jax.nn.sigmoid(gates[:, hid:])
    Zt = jnp.moveaxis(Z, 2, 0)
    Ft = jnp.moveaxis(F, 2, 0)
    if reverse:
        Zt, Ft = Zt[::-1], Ft[::-1]

    def step(h, zf):
        z, f = zf
        h = f * h + (1.0 - f) * z
        return h, h

    h0 = (1.0 - Ft[0]) * Zt[0]
    _, hs = jax.lax.scan(step, h0, (Zt[1:], Ft[1:]))
    hs = jnp.concatenate([h0[None], hs], axis=0)
    if reverse:
        hs = hs[::-1]
    return jnp.moveaxis(hs, 0, 2)


if __name__ == "__main__":
    # Small, deterministic example shapes consistent with QRNN3DLayer.
    N, C_in, hidden = 2, 4, 32
    T, H, W = 8, 16, 16

    key = jax.random.PRNGKey(0)
    kx, kw, kb = jax.random.split(key, 3)
    x = jax.random.normal(kx, (N, C_in, T, H, W), dtype=jnp.float32)
    # Conv3d(in_channels, 2*hidden_channels, kernel_size=3, padding=1) weights.
    fan_in = C_in * 3 * 3 * 3
    w = (jax.random.normal(kw, (2 * hidden, C_in, 3, 3, 3), dtype=jnp.float32)
         / jnp.sqrt(fan_in))
    b = jax.random.normal(kb, (2 * hidden,), dtype=jnp.float32) * 0.1

    out = qrnn3d_layer_forward(x, w, b, reverse=False)
    out = jax.block_until_ready(out)
    assert out.shape == (N, hidden, T, H, W), out.shape

    ref = jax.block_until_ready(_reference_forward(x, w, b, reverse=False))
    err = float(jnp.max(jnp.abs(out - ref)))
    assert jnp.allclose(out, ref, atol=2e-2, rtol=2e-2), err

    # Also exercise the reverse=True path once.
    out_r = jax.block_until_ready(qrnn3d_layer_forward(x, w, b, reverse=True))
    ref_r = jax.block_until_ready(_reference_forward(x, w, b, reverse=True))
    err_r = float(jnp.max(jnp.abs(out_r - ref_r)))
    assert jnp.allclose(out_r, ref_r, atol=2e-2, rtol=2e-2), err_r

    print("KERNEL_OK")
</pallas_src>

<mosaic_0001>
module attributes {stable_mosaic.version = 11 : i64} {
  func.func @_fused_qrnn_kernel(%arg0: i32, %arg1: i32, %arg2: memref<1x1x4x290xbf16, #tpu.memory_space<vmem>>, %arg3: memref<1x1x4x290xbf16, #tpu.memory_space<vmem>>, %arg4: memref<1x1x4x290xbf16, #tpu.memory_space<vmem>>, %arg5: memref<64x108xbf16, #tpu.memory_space<vmem>>, %arg6: memref<64x1xf32, #tpu.memory_space<vmem>>, %arg7: memref<2x256xbf16, #tpu.memory_space<vmem>>, %arg8: memref<1x1x32x256xf32, #tpu.memory_space<vmem>>, %arg9: memref<32x256xf32, #tpu.memory_space<vmem>>) attributes {dimension_semantics = [#tpu.dimension_semantics<parallel>, #tpu.dimension_semantics<arbitrary>], iteration_bounds = array<i64: 2, 8>, scalar_prefetch = 0 : i64, scratch_operands = 1 : i64, tpu.core_type = #tpu.core_type<tc>, window_params = [{transform_indices = @transform_0, window_bounds = array<i64: 1, 1, 4, 290>}, {transform_indices = @transform_1, window_bounds = array<i64: 1, 1, 4, 290>}, {transform_indices = @transform_2, window_bounds = array<i64: 1, 1, 4, 290>}, {pipeline_mode = #tpu.pipeline_mode<synchronous>, transform_indices = @transform_3, window_bounds = array<i64: 64, 108>}, {pipeline_mode = #tpu.pipeline_mode<synchronous>, transform_indices = @transform_4, window_bounds = array<i64: 64, 1>}, {pipeline_mode = #tpu.pipeline_mode<synchronous>, transform_indices = @transform_5, window_bounds = array<i64: 2, 256>}, {transform_indices = @transform_6, window_bounds = array<i64: 1, 1, 32, 256>}]} {
    %c0_i32 = arith.constant 0 : i32
    %0 = arith.cmpi eq, %arg1, %c0_i32 : i32
    %1 = arith.extui %0 : i1 to i32
    %c0_i32_0 = arith.constant 0 : i32
    %2 = arith.cmpi ne, %1, %c0_i32_0 : i32
    scf.if %2 {
      %cst_28 = arith.constant 0.000000e+00 : f32
      %55 = vector.broadcast %cst_28 : f32 to vector<32x256xf32>
      %c0_29 = arith.constant 0 : index
      %c0_30 = arith.constant 0 : index
      %56 = vector.load %arg9[%c0_29, %c0_30] : memref<32x256xf32, #tpu.memory_space<vmem>>, vector<32x256xf32>
      tpu.vector_store %arg9[%c0_29, %c0_30], %55 {strides = array<i32>} : memref<32x256xf32, #tpu.memory_space<vmem>>, vector<32x256xf32>,
    } else {
    }
    %c0 = arith.constant 0 : index
    %c0_1 = arith.constant 0 : index
    %c0_2 = arith.constant 0 : index
    %c0_3 = arith.constant 0 : index
    %3 = vector.load %arg2[%c0, %c0_1, %c0_2, %c0_3] : memref<1x1x4x290xbf16, #tpu.memory_space<vmem>>, vector<1x1x4x290xbf16>
    %4 = vector.shape_cast %3 : vector<1x1x4x290xbf16> to vector<4x290xbf16>
    %c0_4 = arith.constant 0 : index
    %c0_5 = arith.constant 0 : index
    %c0_6 = arith.constant 0 : index
    %c0_7 = arith.constant 0 : index
    %5 = vector.load %arg3[%c0_4, %c0_5, %c0_6, %c0_7] : memref<1x1x4x290xbf16, #tpu.memory_space<vmem>>, vector<1x1x4x290xbf16>
    %6 = vector.shape_cast %5 : vector<1x1x4x290xbf16> to vector<4x290xbf16>
    %c0_8 = arith.constant 0 : index
    %c0_9 = arith.constant 0 : index
    %c0_10 = arith.constant 0 : index
    %c0_11 = arith.constant 0 : index
    %7 = vector.load %arg4[%c0_8, %c0_9, %c0_10, %c0_11] : memref<1x1x4x290xbf16, #tpu.memory_space<vmem>>, vector<1x1x4x290xbf16>
    %8 = vector.shape_cast %7 : vector<1x1x4x290xbf16> to vector<4x290xbf16>
    %9 = tpu.concatenate %4, %6, %8 in 0 : vector<4x290xbf16>, vector<4x290xbf16>, vector<4x290xbf16> -> vector<12x290xbf16>
    %c0_12 = arith.constant 0 : index
    %c0_13 = arith.constant 0 : index
    %10 = vector.load %arg7[%c0_12, %c0_13] : memref<2x256xbf16, #tpu.memory_space<vmem>>, vector<1x256xbf16>
    %c1 = arith.constant 1 : index
    %c0_14 = arith.constant 0 : index
    %11 = vector.load %arg7[%c1, %c0_14] : memref<2x256xbf16, #tpu.memory_space<vmem>>, vector<1x256xbf16>
    %12 = vector.extract_strided_slice %9 {offsets = [0, 0], sizes = [12, 256], strides = [1, 1]} : vector<12x290xbf16> to vector<12x256xbf16>
    %13 = vector.broadcast %10 : vector<1x256xbf16> to vector<12x256xbf16>
    %14 = arith.mulf %12, %13 : vector<12x256xbf16>
    %15 = vector.extract_strided_slice %9 {offsets = [0, 1], sizes = [12, 256], strides = [1, 1]} : vector<12x290xbf16> to vector<12x256xbf16>
    %16 = vector.extract_strided_slice %9 {offsets = [0, 2], sizes = [12, 256], strides = [1, 1]} : vector<12x290xbf16> to vector<12x256xbf16>
    %17 = vector.broadcast %11 : vector<1x256xbf16> to vector<12x256xbf16>
    %18 = arith.mulf %16, %17 : vector<12x256xbf16>
    %19 = vector.extract_strided_slice %9 {offsets = [0, 16], sizes = [12, 256], strides = [1, 1]} : vector<12x290xbf16> to vector<12x256xbf16>
    %20 = vector.broadcast %10 : vector<1x256xbf16> to vector<12x256xbf16>
    %21 = arith.mulf %19, %20 : vector<12x256xbf16>
    %22 = vector.extract_strided_slice %9 {offsets = [0, 17], sizes = [12, 256], strides = [1, 1]} : vector<12x290xbf16> to vector<12x256xbf16>
    %23 = vector.extract_strided_slice %9 {offsets = [0, 18], sizes = [12, 256], strides = [1, 1]} : vector<12x290xbf16> to vector<12x256xbf16>
    %24 = vector.broadcast %11 : vector<1x256xbf16> to vector<12x256xbf16>
    %25 = arith.mulf %23, %24 : vector<12x256xbf16>
    %26 = vector.extract_strided_slice %9 {offsets = [0, 32], sizes = [12, 256], strides = [1, 1]} : vector<12x290xbf16> to vector<12x256xbf16>
    %27 = vector.broadcast %10 : vector<1x256xbf16> to vector<12x256xbf16>
    %28 = arith.mulf %26, %27 : vector<12x256xbf16>
    %29 = vector.extract_strided_slice %9 {offsets = [0, 33], sizes = [12, 256], strides = [1, 1]} : vector<12x290xbf16> to vector<12x256xbf16>
    %30 = vector.extract_strided_slice %9 {offsets = [0, 34], sizes = [12, 256], strides = [1, 1]} : vector<12x290xbf16> to vector<12x256xbf16>
    %31 = vector.broadcast %11 : vector<1x256xbf16> to vector<12x256xbf16>
    %32 = arith.mulf %30, %31 : vector<12x256xbf16>
    %33 = tpu.concatenate %14, %15, %18, %21, %22, %25, %28, %29, %32 in 0 : vector<12x256xbf16>, vector<12x256xbf16>, vector<12x256xbf16>, vector<12x256xbf16>, vector<12x256xbf16>, vector<12x256xbf16>, vector<12x256xbf16>, vector<12x256xbf16>, vector<12x256xbf16> -> vector<108x256xbf16>
    %c0_15 = arith.constant 0 : index
    %c0_16 = arith.constant 0 : index
    %34 = vector.load %arg5[%c0_15, %c0_16] : memref<64x108xbf16, #tpu.memory_space<vmem>>, vector<64x108xbf16>
    %cst = arith.constant dense<0.000000e+00> : vector<64x256xf32>
    %35 = tpu.matmul %34, %33, %cst {dimension_numbers = #tpu.dot_dimension_numbers<[1], [0], [0], [1], [0, 0, 1, 1], [], []>} : vector<64x108xbf16>, vector<108x256xbf16>, vector<64x256xf32> -> vector<64x256xf32>
    %c0_17 = arith.constant 0 : index
    %c0_18 = arith.constant 0 : index
    %36 = vector.load %arg6[%c0_17, %c0_18] : memref<64x1xf32, #tpu.memory_space<vmem>>, vector<64x1xf32>
    %37 = vector.broadcast %36 : vector<64x1xf32> to vector<64x256xf32>
    %38 = arith.addf %35, %37 : vector<64x256xf32>
    %39 = vector.extract_strided_slice %38 {offsets = [0, 0], sizes = [32, 256], strides = [1, 1]} : vector<64x256xf32> to vector<32x256xf32>
    %40 = math.tanh %39 : vector<32x256xf32>
    %41 = vector.extract_strided_slice %38 {offsets = [32, 0], sizes = [32, 256], strides = [1, 1]} : vector<64x256xf32> to vector<32x256xf32>
    %42 = arith.negf %41 : vector<32x256xf32>
    %43 = math.exp %42 : vector<32x256xf32>
    %cst_19 = arith.constant 1.000000e+00 : f32
    %44 = vector.broadcast %cst_19 : f32 to vector<32x256xf32>
    %45 = arith.addf %44, %43 : vector<32x256xf32>
    %46 = arith.divf %44, %45 : vector<32x256xf32>
    %c0_20 = arith.constant 0 : index
    %c0_21 = arith.constant 0 : index
    %47 = vector.load %arg9[%c0_20, %c0_21] : memref<32x256xf32, #tpu.memory_space<vmem>>, vector<32x256xf32>
    %48 = arith.subf %47, %40 : vector<32x256xf32>
    %49 = arith.mulf %46, %48 : vector<32x256xf32>
    %50 = arith.addf %40, %49 : vector<32x256xf32>
    %c0_22 = arith.constant 0 : index
    %c0_23 = arith.constant 0 : index
    %51 = vector.load %arg9[%c0_22, %c0_23] : memref<32x256xf32, #tpu.memory_space<vmem>>, vector<32x256xf32>
    tpu.vector_store %arg9[%c0_22, %c0_23], %50 {strides = array<i32>} : memref<32x256xf32, #tpu.memory_space<vmem>>, vector<32x256xf32>,
    %c0_24 = arith.constant 0 : index
    %c0_25 = arith.constant 0 : index
    %c0_26 = arith.constant 0 : index
    %c0_27 = arith.constant 0 : index
    %52 = vector.load %arg8[%c0_24, %c0_25, %c0_26, %c0_27] : memref<1x1x32x256xf32, #tpu.memory_space<vmem>>, vector<1x1x32x256xf32>
    %53 = vector.shape_cast %52 : vector<1x1x32x256xf32> to vector<32x256xf32>
    %54 = vector.shape_cast %50 : vector<32x256xf32> to vector<1x1x32x256xf32>
    tpu.vector_store %arg8[%c0_24, %c0_25, %c0_26, %c0_27], %54 {strides = array<i32>} : memref<1x1x32x256xf32, #tpu.memory_space<vmem>>, vector<1x1x32x256xf32>,
    return
  }
  func.func @transform_0(%arg0: i32, %arg1: i32) -> (i32, i32, i32, i32) {
    %c0_i32 = arith.constant 0 : i32
    %0 = arith.addi %arg1, %c0_i32 : i32
    %c0_i32_0 = arith.constant 0 : i32
    %c0_i32_1 = arith.constant 0 : i32
    %c0_i32_2 = arith.constant 0 : i32
    return %arg0, %0, %c0_i32_0, %c0_i32_1 : i32, i32, i32, i32
  }
  func.func @transform_1(%arg0: i32, %arg1: i32) -> (i32, i32, i32, i32) {
    %c1_i32 = arith.constant 1 : i32
    %0 = arith.addi %arg1, %c1_i32 : i32
    %c0_i32 = arith.constant 0 : i32
    %c0_i32_0 = arith.constant 0 : i32
    %c0_i32_1 = arith.constant 0 : i32
    return %arg0, %0, %c0_i32, %c0_i32_0 : i32, i32, i32, i32
  }
  func.func @transform_2(%arg0: i32, %arg1: i32) -> (i32, i32, i32, i32) {
    %c2_i32 = arith.constant 2 : i32
    %0 = arith.addi %arg1, %c2_i32 : i32
    %c0_i32 = arith.constant 0 : i32
    %c0_i32_0 = arith.constant 0 : i32
    %c0_i32_1 = arith.constant 0 : i32
    return %arg0, %0, %c0_i32, %c0_i32_0 : i32, i32, i32, i32
  }
  func.func @transform_3(%arg0: i32, %arg1: i32) -> (i32, i32) {
    %c0_i32 = arith.constant 0 : i32
    %c0_i32_0 = arith.constant 0 : i32
    %c0_i32_1 = arith.constant 0 : i32
    return %c0_i32, %c0_i32_0 : i32, i32
  }
  func.func @transform_4(%arg0: i32, %arg1: i32) -> (i32, i32) {
    %c0_i32 = arith.constant 0 : i32
    %c0_i32_0 = arith.constant 0 : i32
    %c0_i32_1 = arith.constant 0 : i32
    return %c0_i32, %c0_i32_0 : i32, i32
  }
  func.func @transform_5(%arg0: i32, %arg1: i32) -> (i32, i32) {
    %c0_i32 = arith.constant 0 : i32
    %c0_i32_0 = arith.constant 0 : i32
    %c0_i32_1 = arith.constant 0 : i32
    return %c0_i32, %c0_i32_0 : i32, i32
  }
  func.func @transform_6(%arg0: i32, %arg1: i32) -> (i32, i32, i32, i32) {
    %c0_i32 = arith.constant 0 : i32
    %c0_i32_0 = arith.constant 0 : i32
    %c0_i32_1 = arith.constant 0 : i32
    return %arg0, %arg1, %c0_i32, %c0_i32_0 : i32, i32, i32, i32
  }
}

</mosaic_0001>

<llo_original>
// kernel: qrnn3d_layer_forward.1
$region0: #{qrnn3d_layer_forward.1}
  #allocation0 [shape = 'u32[]', space=smem, size = 0x4, offset = 0x4, fixed_abs, tag = 'smem constant byte address 0x4 - core index']
  #allocation1 [shape = 'u32[144,128]{1,0:T(1,128)}', space=vmem, size = 0x12000, scoped, tag = 'internal scratch']
  #allocation2 [shape = 'f32[32,256]{1,0:T(8,128)}', space=vmem, size = 0x8000, scoped, tag = 'scratch operand']
  %s0 = inlined_call_operand.vmem [shape: bf16[2,10,4,290], index: 0, kind: input, shape index: {}, may-alias: {0,1,2}]
  %s1 = inlined_call_operand.vmem [shape: bf16[2,10,4,290], index: 1, kind: input, shape index: {}, may-alias: {0,1,2}]
  %s2 = inlined_call_operand.vmem [shape: bf16[2,10,4,290], index: 2, kind: input, shape index: {}, may-alias: {0,1,2}]
  %s3 = inlined_call_operand.vmem [shape: bf16[64,108], index: 3, kind: input, shape index: {}]
  %s4 = inlined_call_operand.vmem [shape: f32[64,1], index: 4, kind: input, shape index: {}]
  %s5 = inlined_call_operand.vmem [shape: bf16[2,256], index: 5, kind: input, shape index: {}]
  %s6 = inlined_call_operand.vmem [shape: f32[2,8,32,256], index: 6, kind: output, shape index: {}]
  %s7 = sld [smem:[#allocation0]]
  $region61: #{qrnn3d_layer_forward.1} parent=0
    _
  %s9 = ssub.s32 1, %s7
  %s10 = scalar_select 0, %s9, %s7
  loop: start=0, step=1, limit=18
  $region2: #{qrnn3d_layer_forward.1} parent=0 // loop_pre_header
    _
  $region3: #{qrnn3d_layer_forward.1} parent=0 // loop_header
    %s12 = sphi 0, %s16
    %p13 = scmp.ge.s32.totalorder %s12, 18
    %s19 = sphi 0, %s31
    %s20 = sphi 0, %s27
    %s21 = sphi 0, %s19
    %s22 = sphi 0, %s20
    %s23 = sphi 0, %s21
    %s24 = sphi 0, %s22
    %s36 = sphi 0, %s38
    %s39 = sphi 0, %s36
    %s40 = sphi 0, %s39
    %s56 = sphi 0, %s40
    %s66 = sphi 0, %s68
    %s69 = sphi 0, %s66
    %s70 = sphi 0, %s69
    %s86 = sphi 0, %s70
    %s96 = sphi 0, %s98
    %s99 = sphi 0, %s96
    %s100 = sphi 0, %s99
    %s116 = sphi 0, %s100
    %s120 = sphi 0, %s120
    %s122 = sphi 0, %s120
    %s123 = sphi 0, %s122
    %s137 = sphi 0, %s123
    %s141 = sphi 0, %s141
    %s143 = sphi 0, %s141
    %s144 = sphi 0, %s143
    %s158 = sphi 0, %s144
    %s162 = sphi 0, %s162
    %s164 = sphi 0, %s162
    %s165 = sphi 0, %s164
    %s179 = sphi 0, %s165
    %s187 = sphi 0, %s189
    %s190 = sphi 0, %s187
    %s191 = sphi 0, %s190
    %s207 = sphi 0, %s191
  $region4: #{qrnn3d_layer_forward.1} parent=0 // loop_header_branch
    %15 = sbr.rel (%p13) target = $region8
  $region5: #{qrnn3d_layer_forward.1} parent=0 // loop_body
    %s17 = ssub.s32 %s12, 1
    %s18 = ssub.s32 %s12, 2
    %s25 = sadd.s32 1, %s20
    %p26 = scmp.ge.s32.totalorder %s25, 8
    %s27 = scalar_select %p26, 0, %s25
    %s28 = sadd.s32 1, %s19
    %s29 = scalar_select %p26, %s28, %s19
    %p30 = scmp.ge.s32.totalorder %s29, 2
    %s31 = scalar_select %p30, 0, %s29
    %s32 = ssub.s32 %s19, %s31
    %s33 = ssub.s32 %s20, %s27
    %s34 = sor.u32 %s32, %s33
    %p35 = scmp.eq.s32.totalorder %s34, 0
    %s37 = sadd.s32 %s36, 1
    %s38 = scalar_select %p35, %s36, %s37
    %p41 = pneg %p35
    %p42 = scmp.eq.s32.totalorder %s12, 15
    %p43 = por %p41, %p42
    %p44 = scmp.ne.s32.totalorder %s36, %s39
    %p45 = scmp.eq.s32.totalorder %s12, 0
    %p46 = por %p44, %p45
    %p47 = scmp.ne.s32.totalorder %s36, %s39
    %p48 = scmp.eq.s32.totalorder %s17, 15
    %p49 = por %p47, %p48
    %p50 = scmp.ne.s32.totalorder %s39, %s40
    %p51 = scmp.eq.s32.totalorder %s17, 0
    %p52 = por %p50, %p51
    %p53 = scmp.ne.s32.totalorder %s39, %s40
    %p54 = scmp.eq.s32.totalorder %s18, 15
    %p55 = por %p53, %p54
    %p57 = scmp.ne.s32.totalorder %s40, %s56
    %p58 = scmp.eq.s32.totalorder %s18, 0
    %p59 = por %p57, %p58
    %s60 = sadd.s32 %s20, 1
    %s61 = sadd.s32 %s27, 1
    %s62 = ssub.s32 %s19, %s31
    %s63 = ssub.s32 %s60, %s61
    %s64 = sor.u32 %s62, %s63
    %p65 = scmp.eq.s32.totalorder %s64, 0
    %s67 = sadd.s32 %s66, 1
    %s68 = scalar_select %p65, %s66, %s67
    %p71 = pneg %p65
    %p72 = scmp.eq.s32.totalorder %s12, 15
    %p73 = por %p71, %p72
    %p74 = scmp.ne.s32.totalorder %s66, %s69
    %p75 = scmp.eq.s32.totalorder %s12, 0
    %p76 = por %p74, %p75
    %p77 = scmp.ne.s32.totalorder %s66, %s69
    %p78 = scmp.eq.s32.totalorder %s17, 15
    %p79 = por %p77, %p78
    %p80 = scmp.ne.s32.totalorder %s69, %s70
    %p81 = scmp.eq.s32.totalorder %s17, 0
    %p82 = por %p80, %p81
    %p83 = scmp.ne.s32.totalorder %s69, %s70
    %p84 = scmp.eq.s32.totalorder %s18, 15
    %p85 = por %p83, %p84
    %p87 = scmp.ne.s32.totalorder %s70, %s86
    %p88 = scmp.eq.s32.totalorder %s18, 0
    %p89 = por %p87, %p88
    %s90 = sadd.s32 %s20, 2
    %s91 = sadd.s32 %s27, 2
    %s92 = ssub.s32 %s19, %s31
    %s93 = ssub.s32 %s90, %s91
    %s94 = sor.u32 %s92, %s93
    %p95 = scmp.eq.s32.totalorder %s94, 0
    %s97 = sadd.s32 %s96, 1
    %s98 = scalar_select %p95, %s96, %s97
    %p101 = pneg %p95
    %p102 = scmp.eq.s32.totalorder %s12, 15
    %p103 = por %p101, %p102
    %p104 = scmp.ne.s32.totalorder %s96, %s99
    %p105 = scmp.eq.s32.totalorder %s12, 0
    %p106 = por %p104, %p105
    %p107 = scmp.ne.s32.totalorder %s96, %s99
    %p108 = scmp.eq.s32.totalorder %s17, 15
    %p109 = por %p107, %p108
    %p110 = scmp.ne.s32.totalorder %s99, %s100
    %p111 = scmp.eq.s32.totalorder %s17, 0
    %p112 = por %p110, %p111
    %p113 = scmp.ne.s32.totalorder %s99, %s100
    %p114 = scmp.eq.s32.totalorder %s18, 15
    %p115 = por %p113, %p114
    %p117 = scmp.ne.s32.totalorder %s100, %s116
    %p118 = scmp.eq.s32.totalorder %s18, 0
    %p119 = por %p117, %p118
    %s121 = sadd.s32 %s120, 1
    %p124 = scmp.eq.s32.totalorder %s12, 15
    %p125 = scmp.ne.s32.totalorder %s120, %s122
    %p126 = scmp.eq.s32.totalorder %s12, 0
    %p127 = por %p125, %p126
    %p128 = scmp.ne.s32.totalorder %s120, %s122
    %p129 = scmp.eq.s32.totalorder %s17, 15
    %p130 = por %p128, %p129
    %p131 = scmp.ne.s32.totalorder %s122, %s123
    %p132 = scmp.eq.s32.totalorder %s17, 0
    %p133 = por %p131, %p132
    %p134 = scmp.ne.s32.totalorder %s122, %s123
    %p135 = scmp.eq.s32.totalorder %s18, 15
    %p136 = por %p134, %p135
    %p138 = scmp.ne.s32.totalorder %s123, %s137
    %p139 = scmp.eq.s32.totalorder %s18, 0
    %p140 = por %p138, %p139
    %s142 = sadd.s32 %s141, 1
    %p145 = scmp.eq.s32.totalorder %s12, 15
    %p146 = scmp.ne.s32.totalorder %s141, %s143
    %p147 = scmp.eq.s32.totalorder %s12, 0
    %p148 = por %p146, %p147
    %p149 = scmp.ne.s32.totalorder %s141, %s143
    %p150 = scmp.eq.s32.totalorder %s17, 15
    %p151 = por %p149, %p150
    %p152 = scmp.ne.s32.totalorder %s143, %s144
    %p153 = scmp.eq.s32.totalorder %s17, 0
    %p154 = por %p152, %p153
    %p155 = scmp.ne.s32.totalorder %s143, %s144
    %p156 = scmp.eq.s32.totalorder %s18, 15
    %p157 = por %p155, %p156
    %p159 = scmp.ne.s32.totalorder %s144, %s158
    %p160 = scmp.eq.s32.totalorder %s18, 0
    %p161 = por %p159, %p160
    %s163 = sadd.s32 %s162, 1
    %p166 = scmp.eq.s32.totalorder %s12, 15
    %p167 = scmp.ne.s32.totalorder %s162, %s164
    %p168 = scmp.eq.s32.totalorder %s12, 0
    %p169 = por %p167, %p168
    %p170 = scmp.ne.s32.totalorder %s162, %s164
    %p171 = scmp.eq.s32.totalorder %s17, 15
    %p172 = por %p170, %p171
    %p173 = scmp.ne.s32.totalorder %s164, %s165
    %p174 = scmp.eq.s32.totalorder %s17, 0
    %p175 = por %p173, %p174
    %p176 = scmp.ne.s32.totalorder %s164, %s165
    %p177 = scmp.eq.s32.totalorder %s18, 15
    %p178 = por %p176, %p177
    %p180 = scmp.ne.s32.totalorder %s165, %s179
    %p181 = scmp.eq.s32.totalorder %s18, 0
    %p182 = por %p180, %p181
    %s183 = ssub.s32 %s19, %s31
    %s184 = ssub.s32 %s20, %s27
    %s185 = sor.u32 %s183, %s184
    %p186 = scmp.eq.s32.totalorder %s185, 0
    %s188 = sadd.s32 %s187, 1
    %s189 = scalar_select %p186, %s187, %s188
    %p192 = pneg %p186
    %p193 = scmp.eq.s32.totalorder %s12, 15
    %p194 = por %p192, %p193
    %p195 = scmp.ne.s32.totalorder %s187, %s190
    %p196 = scmp.eq.s32.totalorder %s12, 0
    %p197 = por %p195, %p196
    %p198 = scmp.ne.s32.totalorder %s187, %s190
    %p199 = scmp.eq.s32.totalorder %s17, 15
    %p200 = por %p198, %p199
    %p201 = scmp.ne.s32.totalorder %s190, %s191
    %p202 = scmp.eq.s32.totalorder %s17, 0
    %p203 = por %p201, %p202
    %p204 = scmp.ne.s32.totalorder %s190, %s191
    %p205 = scmp.eq.s32.totalorder %s18, 15
    %p206 = por %p204, %p205
    %p208 = scmp.ne.s32.totalorder %s191, %s207
    %p209 = scmp.eq.s32.totalorder %s18, 0
    %p210 = por %p208, %p209
    %p211 = scmp.le.s32.totalorder 1, %s12
    %p212 = scmp.lt.s32.totalorder %s12, 17
    %p213 = pnand %p211, %p212
    %p214 = pneg %p213
    // Predicated region
    $region9: #{qrnn3d_layer_forward.1} parent=5 // pred_check
      _
    $region10: #{qrnn3d_layer_forward.1} parent=5 // pred_check_branch
      %216 = sbr.rel (%p213) target = $region12
    $region11: #{qrnn3d_layer_forward.1} parent=5 // pred_region
      %s217 = ssub.s32 %s12, 1
      // Predicated region
      $region13: #{qrnn3d_layer_forward.1} parent=11 // pred_check
        %p218 = pneg %p133
      $region14: #{qrnn3d_layer_forward.1} parent=11 // pred_check_branch
        %220 = sbr.rel (%p218) target = $region16
      $region15: #{qrnn3d_layer_forward.1} parent=11 // pred_region
        _
      $region16: #{qrnn3d_layer_forward.1} parent=11 // pred_fallthru
        _
      // Predicated region
      $region17: #{qrnn3d_layer_forward.1} parent=11 // pred_check
        %p221 = pneg %p154
      $region18: #{qrnn3d_layer_forward.1} parent=11 // pred_check_branch
        %223 = sbr.rel (%p221) target = $region20
      $region19: #{qrnn3d_layer_forward.1} parent=11 // pred_region
        _
      $region20: #{qrnn3d_layer_forward.1} parent=11 // pred_fallthru
        _
      // Predicated region
      $region21: #{qrnn3d_layer_forward.1} parent=11 // pred_check
        %p224 = pneg %p175
      $region22: #{qrnn3d_layer_forward.1} parent=11 // pred_check_branch
        %226 = sbr.rel (%p224) target = $region24
      $region23: #{qrnn3d_layer_forward.1} parent=11 // pred_region
        _
      $region24: #{qrnn3d_layer_forward.1} parent=11 // pred_fallthru
        _
    $region12: #{qrnn3d_layer_forward.1} parent=5 // pred_fallthru
      _
    %p227 = scmp.lt.s32.totalorder %s12, 16
    // Predicated region
    $region25: #{qrnn3d_layer_forward.1} parent=5 // pred_check
      %p228 = pneg %p227
    $region26: #{qrnn3d_layer_forward.1} parent=5 // pred_check_branch
      %230 = sbr.rel (%p228) target = $region28
    $region27: #{qrnn3d_layer_forward.1} parent=5 // pred_region
      // Predicated region
      $region29: #{qrnn3d_layer_forward.1} parent=27 // pred_check
        %p231 = pneg %p46
      $region30: #{qrnn3d_layer_forward.1} parent=27 // pred_check_branch
        %233 = sbr.rel (%p231) target = $region32
      $region31: #{qrnn3d_layer_forward.1} parent=27 // pred_region
        %p234 = scmp.lt.s32.totalorder %s19, 1
        %s235 = scalar_select %p234, %s19, 1
        %p236 = scmp.lt.s32.totalorder %s20, 9
        %s237 = scalar_select %p236, %s20, 9
        %s238 = smul.addr %s237, 3
        %s239 = smul.addr %s235, 30
        %s240 = sadd.s32 %s238, %s239
        %s241 = smul.addr %s240, 2
        %s242 = scalar_lea.vmem %s0, %s241
      $region32: #{qrnn3d_layer_forward.1} parent=27 // pred_fallthru
        _
      // Predicated region
      $region33: #{qrnn3d_layer_forward.1} parent=27 // pred_check
        %p243 = pneg %p76
      $region34: #{qrnn3d_layer_forward.1} parent=27 // pred_check_branch
        %245 = sbr.rel (%p243) target = $region36
      $region35: #{qrnn3d_layer_forward.1} parent=27 // pred_region
        %s246 = sadd.s32 %s20, 1
        %p247 = scmp.lt.s32.totalorder %s19, 1
        %s248 = scalar_select %p247, %s19, 1
        %p249 = scmp.lt.s32.totalorder %s246, 9
        %s250 = scalar_select %p249, %s246, 9
        %s251 = smul.addr %s250, 3
        %s252 = smul.addr %s248, 30
        %s253 = sadd.s32 %s251, %s252
        %s254 = smul.addr %s253, 2
        %s255 = scalar_lea.vmem %s1, %s254
        %s256 = sadd.s32 %s20, 1
      $region36: #{qrnn3d_layer_forward.1} parent=27 // pred_fallthru
        _
      // Predicated region
      $region37: #{qrnn3d_layer_forward.1} parent=27 // pred_check
        %p257 = pneg %p106
      $region38: #{qrnn3d_layer_forward.1} parent=27 // pred_check_branch
        %259 = sbr.rel (%p257) target = $region40
      $region39: #{qrnn3d_layer_forward.1} parent=27 // pred_region
        %s260 = sadd.s32 %s20, 2
        %p261 = scmp.lt.s32.totalorder %s19, 1
        %s262 = scalar_select %p261, %s19, 1
        %p263 = scmp.lt.s32.totalorder %s260, 9
        %s264 = scalar_select %p263, %s260, 9
        %s265 = smul.addr %s264, 3
        %s266 = smul.addr %s262, 30
        %s267 = sadd.s32 %s265, %s266
        %s268 = smul.addr %s267, 2
        %s269 = scalar_lea.vmem %s2, %s268
        %s270 = sadd.s32 %s20, 2
      $region40: #{qrnn3d_layer_forward.1} parent=27 // pred_fallthru
        _
    $region28: #{qrnn3d_layer_forward.1} parent=5 // pred_fallthru
      _
    %p271 = scmp.le.s32.totalorder 1, %s12
    %p272 = scmp.lt.s32.totalorder %s12, 17
    %p273 = pnand %p271, %p272
    %p274 = pneg %p273
    // Predicated region
    $region41: #{qrnn3d_layer_forward.1} parent=5 // pred_check
      _
    $region42: #{qrnn3d_layer_forward.1} parent=5 // pred_check_branch
      %276 = sbr.rel (%p273) target = $region44
    $region43: #{qrnn3d_layer_forward.1} parent=5 // pred_region
      %s277 = ssub.s32 %s12, 1
      %p278 = scmp.lt.s32.totalorder %s21, 1
      %s279 = scalar_select %p278, %s21, 1
      %p280 = scmp.lt.s32.totalorder %s22, 9
      %s281 = scalar_select %p280, %s22, 9
      %s282 = smul.addr %s281, 3
      %s283 = smul.addr %s279, 30
      %s284 = sadd.s32 %s282, %s283
      %s285 = smul.addr %s284, 2
      %s286 = scalar_lea.vmem %s0, %s285
      %p287 = pneg %p52
      %p288 = pneg %p49
      %s289 = sadd.s32 %s22, 1
      %p290 = scmp.lt.s32.totalorder %s21, 1
      %s291 = scalar_select %p290, %s21, 1
      %p292 = scmp.lt.s32.totalorder %s289, 9
      %s293 = scalar_select %p292, %s289, 9
      %s294 = smul.addr %s293, 3
      %s295 = smul.addr %s291, 30
      %s296 = sadd.s32 %s294, %s295
      %s297 = smul.addr %s296, 2
      %s298 = scalar_lea.vmem %s1, %s297
      %p299 = pneg %p82
      %p300 = pneg %p79
      %s301 = sadd.s32 %s22, 2
      %p302 = scmp.lt.s32.totalorder %s21, 1
      %s303 = scalar_select %p302, %s21, 1
      %p304 = scmp.lt.s32.totalorder %s301, 9
      %s305 = scalar_select %p304, %s301, 9
      %s306 = smul.addr %s305, 3
      %s307 = smul.addr %s303, 30
      %s308 = sadd.s32 %s306, %s307
      %s309 = smul.addr %s308, 2
      %s310 = scalar_lea.vmem %s2, %s309
      %p311 = pneg %p112
      %p312 = pneg %p109
      %p313 = pneg %p133
      %p314 = pneg %p130
      %p315 = pneg %p154
      %p316 = pneg %p151
      %p317 = pneg %p175
      %p318 = pneg %p172
      %p319 = pneg %p203
      %p320 = pneg %p200
      %p321 = scmp.lt.s32.totalorder %s21, 1
      %s322 = scalar_select %p321, %s21, 1
      %p323 = scmp.lt.s32.totalorder %s22, 7
      %s324 = scalar_select %p323, %s22, 7
      %s325 = smul.addr %s324, 8
      %s326 = smul.addr %s322, 64
      %s327 = sadd.s32 %s325, %s326
      %s328 = smul.addr %s327, 8
      %s329 = scalar_lea.vmem %s6, %s328
      %p330 = scmp.lt.s32.totalorder %s21, 1
      %s331 = scalar_select %p330, %s21, 1
      %p332 = scmp.lt.s32.totalorder %s22, 9
      %s333 = scalar_select %p332, %s22, 9
      %s334 = smul.addr %s333, 3
      %s335 = smul.addr %s331, 30
      %s336 = sadd.s32 %s334, %s335
      %s337 = smul.addr %s336, 2
      %s338 = scalar_lea.vmem %s0, %s337
      %s339 = sadd.s32 %s22, 1
      %p340 = scmp.lt.s32.totalorder %s21, 1
      %s341 = scalar_select %p340, %s21, 1
      %p342 = scmp.lt.s32.totalorder %s339, 9
      %s343 = scalar_select %p342, %s339, 9
      %s344 = smul.addr %s343, 3
      %s345 = smul.addr %s341, 30
      %s346 = sadd.s32 %s344, %s345
      %s347 = smul.addr %s346, 2
      %s348 = scalar_lea.vmem %s1, %s347
      %s349 = sadd.s32 %s22, 1
      %s350 = sadd.s32 %s22, 2
      %p351 = scmp.lt.s32.totalorder %s21, 1
      %s352 = scalar_select %p351, %s21, 1
      %p353 = scmp.lt.s32.totalorder %s350, 9
      %s354 = scalar_select %p353, %s350, 9
      %s355 = smul.addr %s354, 3
      %s356 = smul.addr %s352, 30
      %s357 = sadd.s32 %s355, %s356
      %s358 = smul.addr %s357, 2
      %s359 = scalar_lea.vmem %s2, %s358
      %s360 = sadd.s32 %s22, 2
      %p361 = scmp.lt.s32.totalorder %s21, 1
      %s362 = scalar_select %p361, %s21, 1
      %p363 = scmp.lt.s32.totalorder %s22, 7
      %s364 = scalar_select %p363, %s22, 7
      %s365 = smul.addr %s364, 8
      %s366 = smul.addr %s362, 64
      %s367 = sadd.s32 %s365, %s366
      %s368 = smul.addr %s367, 8
      %s369 = scalar_lea.vmem %s6, %s368
      %p371 = scmp.eq.s32.totalorder %s22, 0
      // Predicated region
      $region45: #{qrnn3d_layer_forward.1} parent=43 // pred_check
        %p372 = pneg %p371
      $region46: #{qrnn3d_layer_forward.1} parent=43 // pred_check_branch
        %374 = sbr.rel (%p372) target = $region48
      $region47: #{qrnn3d_layer_forward.1} parent=43 // pred_region
        %375 = vst [vmem:[#allocation2] sm:$0xff] 0.0
        %376 = vst [vmem:[#allocation2 + $0x8] sm:$0xff] 0.0
        %377 = vst [vmem:[#allocation2 + $0x10] sm:$0xff] 0.0
        %378 = vst [vmem:[#allocation2 + $0x18] sm:$0xff] 0.0
        %379 = vst [vmem:[#allocation2 + $0x20] sm:$0xff] 0.0
        %380 = vst [vmem:[#allocation2 + $0x28] sm:$0xff] 0.0
        %381 = vst [vmem:[#allocation2 + $0x30] sm:$0xff] 0.0
        %382 = vst [vmem:[#allocation2 + $0x38] sm:$0xff] 0.0
      $region48: #{qrnn3d_layer_forward.1} parent=43 // pred_fallthru
        _
      %v383 = vld [vmem:[%s338] sm:$0x3f]
      %v384 = vld [vmem:[%s348] sm:$0x3f]
      %v385 = vld [vmem:[%s359] sm:$0x3f]
      %v387 = vcombine.high %v383, %v383
      %v389 = vunpack.c.l.s4 1983009808
      %v390 = vunpack.c.0.s8 %v389
      %v391 = vlaneseq
      %v392 = vshrl.u32 %v391, 7
      %v393 = vsub.s32 %v390, %v392
      %v394 = vrot.slane %v383, %v393
      %v396 = vunpack.c.l.s4 1983009808
      %v397 = vunpack.c.0.s8 %v396
      %v398 = vlaneseq
      %v399 = vshrl.u32 %v398, 7
      %v400 = vsub.s32 %v397, %v399
      %v401 = vrot.slane %v387, %v400
      %v402 = vcombine.high %v394, %v394
      %v404 = vcombine.low %v384, %v384
      %v406 = vunpack.c.l.s4 1983009808
      %v407 = vunpack.c.0.s8 %v406
      %v408 = vlaneseq
      %v409 = vshrl.u32 %v408, 7
      %v410 = vsub.s32 %v407, %v409
      %v411 = vrot.slane %v404, %v410
      %v413 = vunpack.c.l.s4 1983009808
      %v414 = vunpack.c.0.s8 %v413
      %v415 = vlaneseq
      %v416 = vshrl.u32 %v415, 7
      %v417 = vsub.s32 %v414, %v416
      %v418 = vrot.slane %v384, %v417
      %v419 = vcombine.high %v411, %v411
      %v421 = vcombine.high %v385, %v385
      %v423 = vunpack.c.l.s4 1983009808
      %v424 = vunpack.c.0.s8 %v423
      %v425 = vlaneseq
      %v426 = vshrl.u32 %v425, 7
      %v427 = vsub.s32 %v424, %v426
      %v428 = vrot.slane %v385, %v427
      %v430 = vunpack.c.l.s4 1983009808
      %v431 = vunpack.c.0.s8 %v430
      %v432 = vlaneseq
      %v433 = vshrl.u32 %v432, 7
      %v434 = vsub.s32 %v431, %v433
      %v435 = vrot.slane %v421, %v434
      %v436 = vcombine.low %v428, %v428
      %v437 = vcombine.low %v435, %v435
      %vm438 = vcmask 1041408
      %v441 = vsel %vm438, %v394, %v411
      %v444 = vsel %vm438, %v402, %v419
      %v447 = vsel %vm438, %v401, %v418
      %vm448 = vcmask 1043456
      %v450 = vsel %vm448, %v441, %v436
      %v453 = vsel %vm448, %v444, %v428
      %v456 = vsel %vm448, %v447, %v437
      %v458 = vld [vmem:[%s5] sm:$0x3]
      %v461 = vunpack.c.l.s4 1966171168
      %v462 = vunpack.c.0.s8 %v461
      %v463 = vlaneseq
      %v464 = vshrl.u32 %v463, 7
      %v465 = vsub.s32 %v462, %v464
      %v466 = vrot.slane %v458, %v465
      %v467 = vcombine.high %v466, %v466
      %v469 = vunpack.c.l.s4 1966171168
      %v470 = vunpack.c.0.s8 %v469
      %v471 = vlaneseq
      %v472 = vshrl.u32 %v471, 7
      %v473 = vsub.s32 %v470, %v472
      %v474 = vrot.slane %v466, %v473
      %v476 = vunpack.c.l.s4 1966171168
      %v477 = vunpack.c.0.s8 %v476
      %v478 = vlaneseq
      %v479 = vshrl.u32 %v478, 7
      %v480 = vsub.s32 %v477, %v479
      %v481 = vrot.slane %v467, %v480
      %v483 = vpack.i.b16 %v474, %v474
      %v485 = vlaneseq
      %v486 = vshrl.u32 %v485, 7
      %v487 = vsub.s32 0, %v486
      %v488 = vrot.slane %v483, %v487
      %v490 = vpack.i.b16 %v481, %v481
      %v492 = vlaneseq
      %v493 = vshrl.u32 %v492, 7
      %v494 = vsub.s32 0, %v493
      %v495 = vrot.slane %v490, %v494
      %v496 = vmul.bf16 %v450, %v488
      %v497 = vmul.bf16 %v453, %v495
      %v498 = vshrl.u32 %v474, 16
      %v499 = vpack.i.b16 %v498, %v498
      %v501 = vlaneseq
      %v502 = vshrl.u32 %v501, 7
      %v503 = vsub.s32 0, %v502
      %v504 = vrot.slane %v499, %v503
      %v505 = vshrl.u32 %v481, 16
      %v506 = vpack.i.b16 %v505, %v505
      %v508 = vlaneseq
      %v509 = vshrl.u32 %v508, 7
      %v510 = vsub.s32 0, %v509
      %v511 = vrot.slane %v506, %v510
      %514 = vrot.lane.b32.xlu0 %v504, 2
      %v515 = vpop.permute.xlu0 %514
      %516 = vrot.lane.b32.xlu0 %v511, 2
      %v517 = vpop.permute.xlu0 %516
      %vm518 = vcmask 15360
      %v519 = vsel %vm518, %v515, %v517
      %v523 = vmul.bf16 %v450, %v515
      %v524 = vmul.bf16 %v453, %v519
      %v525 = vmul.bf16 %v456, %v517
      %528 = vrot.lane.b32.xlu0 %v488, 16
      %v529 = vpop.permute.xlu0 %528
      %530 = vrot.lane.b32.xlu0 %v495, 16
      %v531 = vpop.permute.xlu0 %530
      %vm532 = vcmask 130048
      %v533 = vsel %vm532, %v529, %v531
      %v537 = vmul.bf16 %v450, %v529
      %v538 = vmul.bf16 %v453, %v533
      %v539 = vmul.bf16 %v456, %v531
      %540 = vrot.lane.b32.xlu0 %v504, 18
      %v541 = vpop.permute.xlu0 %540
      %542 = vrot.lane.b32.xlu0 %v511, 18
      %v543 = vpop.permute.xlu0 %542
      %vm544 = vcmask 146432
      %v545 = vsel %vm544, %v541, %v543
      %v549 = vmul.bf16 %v450, %v541
      %v550 = vmul.bf16 %v453, %v545
      %v551 = vmul.bf16 %v456, %v543
      %552 = vrot.lane.b32.xlu0 %v488, 32
      %v553 = vpop.permute.xlu0 %552
      %554 = vrot.lane.b32.xlu0 %v495, 32
      %v555 = vpop.permute.xlu0 %554
      %vm556 = vcmask 261120
      %v557 = vsel %vm556, %v553, %v555
      %v561 = vmul.bf16 %v450, %v553
      %v562 = vmul.bf16 %v453, %v557
      %v563 = vmul.bf16 %v456, %v555
      %564 = vrot.lane.b32.xlu0 %v504, 34
      %v565 = vpop.permute.xlu0 %564
      %566 = vrot.lane.b32.xlu0 %v511, 34
      %v567 = vpop.permute.xlu0 %566
      %vm568 = vcmask 277504
      %v569 = vsel %vm568, %v565, %v567
      %v573 = vmul.bf16 %v450, %v565
      %v574 = vmul.bf16 %v453, %v569
      %v575 = vmul.bf16 %v456, %v567
      %v579 = vrot.slane %v450, 2
      %v580 = vrot.slane %v453, 2
      %v581 = vrot.slane %v456, 2
      %582 = vrot.lane.b32.xlu0 %v579, 127
      %v583 = vpop.permute.xlu0 %582
      %584 = vrot.lane.b32.xlu0 %v580, 127
      %v585 = vpop.permute.xlu0 %584
      %586 = vrot.lane.b32.xlu0 %v581, 127
      %v587 = vpop.permute.xlu0 %586
      %vm588 = vcmask 1039360
      %v589 = vsel %vm588, %v583, %v585
      %v590 = vsel %vm588, %v585, %v587
      %v594 = vrot.slane %v523, 4
      %v595 = vrot.slane %v524, 4
      %v596 = vrot.slane %v525, 4
      %597 = vrot.lane.b32.xlu0 %v594, 126
      %v598 = vpop.permute.xlu0 %597
      %599 = vrot.lane.b32.xlu0 %v595, 126
      %v600 = vpop.permute.xlu0 %599
      %601 = vrot.lane.b32.xlu0 %v596, 126
      %v602 = vpop.permute.xlu0 %601
      %vm603 = vcmask 1031168
      %v604 = vsel %vm603, %v598, %v600
      %v605 = vsel %vm603, %v600, %v602
      %v609 = vrot.slane %v537, 6
      %v610 = vrot.slane %v538, 6
      %v611 = vrot.slane %v539, 6
      %612 = vrot.lane.b32.xlu0 %v609, 112
      %v613 = vpop.permute.xlu0 %612
      %614 = vrot.lane.b32.xlu0 %v610, 112
      %v615 = vpop.permute.xlu0 %614
      %616 = vrot.lane.b32.xlu0 %v611, 112
      %v617 = vpop.permute.xlu0 %616
      %vm618 = vcmask 916480
      %v619 = vsel %vm618, %v613, %v615
      %v620 = vsel %vm618, %v615, %v617
      %621 = vrot.lane.b32.xlu0 %v450, 111
      %v622 = vpop.permute.xlu0 %621
      %623 = vrot.lane.b32.xlu0 %v453, 111
      %v624 = vpop.permute.xlu0 %623
      %625 = vrot.lane.b32.xlu0 %v456, 111
      %v626 = vpop.permute.xlu0 %625
      %vm627 = vcmask 908288
      %v628 = vsel %vm627, %v622, %v624
      %v629 = vsel %vm627, %v624, %v626
      %v633 = vrot.slane %v549, 2
      %v634 = vrot.slane %v550, 2
      %v635 = vrot.slane %v551, 2
      %636 = vrot.lane.b32.xlu0 %v633, 110
      %v637 = vpop.permute.xlu0 %636
      %638 = vrot.lane.b32.xlu0 %v634, 110
      %v639 = vpop.permute.xlu0 %638
      %640 = vrot.lane.b32.xlu0 %v635, 110
      %v641 = vpop.permute.xlu0 %640
      %vm642 = vcmask 900096
      %v643 = vsel %vm642, %v637, %v639
      %v644 = vsel %vm642, %v639, %v641
      %v648 = vrot.slane %v561, 4
      %v649 = vrot.slane %v562, 4
      %v650 = vrot.slane %v563, 4
      %651 = vrot.lane.b32.xlu0 %v648, 96
      %v652 = vpop.permute.xlu0 %651
      %653 = vrot.lane.b32.xlu0 %v649, 96
      %v654 = vpop.permute.xlu0 %653
      %655 = vrot.lane.b32.xlu0 %v650, 96
      %v656 = vpop.permute.xlu0 %655
      %vm657 = vcmask 785408
      %v658 = vsel %vm657, %v652, %v654
      %v659 = vsel %vm657, %v654, %v656
      %v660 = vrot.slane %v450, 6
      %v661 = vrot.slane %v453, 6
      %v662 = vrot.slane %v456, 6
      %663 = vrot.lane.b32.xlu0 %v660, 95
      %v664 = vpop.permute.xlu0 %663
      %665 = vrot.lane.b32.xlu0 %v661, 95
      %v666 = vpop.permute.xlu0 %665
      %667 = vrot.lane.b32.xlu0 %v662, 95
      %v668 = vpop.permute.xlu0 %667
      %vm669 = vcmask 777216
      %v670 = vsel %vm669, %v664, %v666
      %v671 = vsel %vm669, %v666, %v668
      %675 = vrot.lane.b32.xlu0 %v573, 94
      %v676 = vpop.permute.xlu0 %675
      %677 = vrot.lane.b32.xlu0 %v574, 94
      %v678 = vpop.permute.xlu0 %677
      %679 = vrot.lane.b32.xlu0 %v575, 94
      %v680 = vpop.permute.xlu0 %679
      %vm681 = vcmask 769024
      %v682 = vsel %vm681, %v676, %v678
      %v683 = vsel %vm681, %v678, %v680
      %vm684 = vcmask 1045504
      %v687 = vsel %vm684, %v496, %v589
      %v691 = vsel %vm684, %v497, %v590
      %v694 = vsel %vm448, %v589, %v604
      %v697 = vsel %vm448, %v590, %v605
      %v700 = vsel %vm438, %v604, %v619
      %v703 = vsel %vm438, %v605, %v620
      %v707 = vsel %vm684, %v628, %v643
      %v711 = vsel %vm684, %v629, %v644
      %v714 = vsel %vm448, %v643, %v658
      %v717 = vsel %vm448, %v644, %v659
      %v720 = vsel %vm438, %v658, %v670
      %v723 = vsel %vm438, %v659, %v671
      %v725 = vld [vmem:[%s3] sm:$0xf]
      %v726 = vld [vmem:[%s3 + $0x4] sm:$0xf]
      %v727 = vld [vmem:[%s3 + $0x8] sm:$0xf]
      %v728 = vld [vmem:[%s3 + $0xc] sm:$0xf]
      %v729 = vld [vmem:[%s3 + $0x10] sm:$0xf]
      %v730 = vld [vmem:[%s3 + $0x14] sm:$0xf]
      %v731 = vld [vmem:[%s3 + $0x18] sm:$0xf]
      %v732 = vld [vmem:[%s3 + $0x1c] sm:$0xf]
      %v733 = vld [vmem:[%s4] sm:$0xff]
      %v734 = vld [vmem:[%s4 + $0x8] sm:$0xff]
      %v735 = vld [vmem:[%s4 + $0x10] sm:$0xff]
      %v736 = vld [vmem:[%s4 + $0x18] sm:$0xff]
      %v737 = vld [vmem:[%s4 + $0x20] sm:$0xff]
      %v738 = vld [vmem:[%s4 + $0x28] sm:$0xff]
      %v739 = vld [vmem:[%s4 + $0x30] sm:$0xff]
      %v740 = vld [vmem:[%s4 + $0x38] sm:$0xff]
      %742 = vset.pattern.permute.xlu0 0
      %743 = vperm.xlu0 %742, %v733
      %v744 = vpop.permute.xlu0 %743
      %747 = vset.pattern.permute.xlu0 0
      %748 = vperm.xlu0 %747, %v734
      %v749 = vpop.permute.xlu0 %748
      %752 = vset.pattern.permute.xlu0 0
      %753 = vperm.xlu0 %752, %v735
      %v754 = vpop.permute.xlu0 %753
      %757 = vset.pattern.permute.xlu0 0
      %758 = vperm.xlu0 %757, %v736
      %v759 = vpop.permute.xlu0 %758
      %762 = vset.pattern.permute.xlu0 0
      %763 = vperm.xlu0 %762, %v737
      %v764 = vpop.permute.xlu0 %763
      %767 = vset.pattern.permute.xlu0 0
      %768 = vperm.xlu0 %767, %v738
      %v769 = vpop.permute.xlu0 %768
      %772 = vset.pattern.permute.xlu0 0
      %773 = vperm.xlu0 %772, %v739
      %v774 = vpop.permute.xlu0 %773
      %777 = vset.pattern.permute.xlu0 0
      %778 = vperm.xlu0 %777, %v740
      %v779 = vpop.permute.xlu0 %778
      %v789 = vunpack.c.l.b16 %v725
      %v790 = vunpack.c.l.b16 %v726
      %v791 = vunpack.c.l.b16 %v727
      %v792 = vunpack.c.l.b16 %v728
      %v793 = vunpack.c.l.b16 %v729
      %v794 = vunpack.c.l.b16 %v730
      %v795 = vunpack.c.l.b16 %v731
      %v796 = vunpack.c.l.b16 %v732
      %v797 = vpack.c.b16 %v790, %v789
      %v798 = vpack.c.b16 %v792, %v791
      %v799 = vpack.c.b16 %v794, %v793
      %v800 = vpack.c.b16 %v796, %v795
      %vm801 = vcmask 883712
      %v803 = vsel %vm801, %v797, 0
      %v806 = vsel %vm801, %v798, 0
      %v809 = vsel %vm801, %v799, 0
      %v812 = vsel %vm801, %v800, 0
      %v815 = vsel %vm684, %v682, 0
      %v818 = vsel %vm684, %v683, 0
      %820 = vmatprep.subr.bf16.mxu0 0
      %821 = vmatpush1.bf16.msra.mxu0 0
      %822 = vmatprep.subr.bf16.mxu0 %v818
      %823 = vmatpush1.bf16.msra.mxu0 %v815
      %824 = vmatprep.subr.bf16.mxu0 %v723
      %825 = vmatpush1.bf16.msra.mxu0 %v720
      %826 = vmatprep.subr.bf16.mxu0 %v717
      %827 = vmatpush1.bf16.msra.mxu0 %v714
      %828 = vmatprep.subr.bf16.mxu0 %v711
      %829 = vmatpush1.bf16.msra.mxu0 %v707
      %830 = vmatprep.subr.bf16.mxu0 %v703
      %831 = vmatpush1.bf16.msra.mxu0 %v700
      %832 = vmatprep.subr.bf16.mxu0 %v697
      %833 = vmatpush1.bf16.msra.mxu0 %v694
      %834 = vmatprep.subr.bf16.mxu0 %v691
      %835 = vmatpush1.bf16.msra.mxu0 %v687
      %836 = vmatprep.subr.bf16.mxu0 0
      %837 = vmatpush2.bf16.msra.mxu0 0
      %838 = vmatprep.subr.bf16.mxu0 0
      %839 = vmatpush2.bf16.msra.mxu0 0
      %840 = vmatprep.subr.bf16.mxu0 0
      %841 = vmatpush2.bf16.msra.mxu0 0
      %842 = vmatprep.subr.bf16.mxu0 0
      %843 = vmatpush2.bf16.msra.mxu0 0
      %844 = vmatprep.subr.bf16.mxu0 0
      %845 = vmatpush2.bf16.msra.mxu0 0
      %846 = vmatprep.subr.bf16.mxu0 0
      %847 = vmatpush2.bf16.msra.mxu0 0
      %848 = vmatprep.subr.bf16.mxu0 0
      %849 = vmatpush2.bf16.msra.mxu0 0
      %850 = vmatprep.subr.bf16.mxu0 0
      %851 = vmatpush2.bf16.msra.mxu0 0
      %852 = vmatprep.mubr.bf16.mxu0 0
      %853 = vmatmul.mubr.bf16.gmra.mxu0 %v803
      %v854 = vpop.f32.mrf.mxu0
      %v855 = vadd.f32 %v744, %v854
      %v856 = vpop.f32.mrf.mxu0
      %v857 = vadd.f32 %v744, %v856
      %v858 = vpop.f32.mrf.mxu0
      %v859 = vadd.f32 %v749, %v858
      %v860 = vpop.f32.mrf.mxu0
      %v861 = vadd.f32 %v749, %v860
      %862 = vmatprep.mubr.bf16.mxu0 0
      %863 = vmatmul.mubr.bf16.gmra.mxu0 %v806
      %v864 = vpop.f32.mrf.mxu0
      %v865 = vadd.f32 %v754, %v864
      %v866 = vpop.f32.mrf.mxu0
      %v867 = vadd.f32 %v754, %v866
      %v868 = vpop.f32.mrf.mxu0
      %v869 = vadd.f32 %v759, %v868
      %v870 = vpop.f32.mrf.mxu0
      %v871 = vadd.f32 %v759, %v870
      %872 = vmatprep.mubr.bf16.mxu0 0
      %873 = vmatmul.mubr.bf16.gmra.mxu0 %v809
      %v874 = vpop.f32.mrf.mxu0
      %v875 = vadd.f32 %v764, %v874
      %v876 = vpop.f32.mrf.mxu0
      %v877 = vadd.f32 %v764, %v876
      %v878 = vpop.f32.mrf.mxu0
      %v879 = vadd.f32 %v769, %v878
      %v880 = vpop.f32.mrf.mxu0
      %v881 = vadd.f32 %v769, %v880
      %882 = vmatprep.mubr.bf16.mxu0 0
      %883 = vmatmul.mubr.bf16.gmra.mxu0 %v812
      %v884 = vpop.f32.mrf.mxu0
      %v885 = vadd.f32 %v774, %v884
      %v886 = vpop.f32.mrf.mxu0
      %v887 = vadd.f32 %v774, %v886
      %v888 = vpop.f32.mrf.mxu0
      %v889 = vadd.f32 %v779, %v888
      %v890 = vpop.f32.mrf.mxu0
      %v891 = vadd.f32 %v779, %v890
      %892 = vdwg.mxu0
      %v893 = vtanh.pop %v855
      %v894 = vtanh.pop %v857
      %v895 = vtanh.pop %v859
      %v896 = vtanh.pop %v861
      %v897 = vtanh.pop %v865
      %v898 = vtanh.pop %v867
      %v899 = vtanh.pop %v869
      %v900 = vtanh.pop %v871
      %v901 = vxor.u32 %v875, 2147483648
      %v902 = vxor.u32 %v877, 2147483648
      %v903 = vxor.u32 %v879, 2147483648
      %v904 = vxor.u32 %v881, 2147483648
      %v905 = vxor.u32 %v885, 2147483648
      %v906 = vxor.u32 %v887, 2147483648
      %v907 = vxor.u32 %v889, 2147483648
      %v908 = vxor.u32 %v891, 2147483648
      %v909 = vmul.f32 %v901, 1.442695
      %v910 = vpow.pop %v909
      %v911 = vmul.f32 %v902, 1.442695
      %v912 = vpow.pop %v911
      %v913 = vmul.f32 %v903, 1.442695
      %v914 = vpow.pop %v913
      %v915 = vmul.f32 %v904, 1.442695
      %v916 = vpow.pop %v915
      %v917 = vmul.f32 %v905, 1.442695
      %v918 = vpow.pop %v917
      %v919 = vmul.f32 %v906, 1.442695
      %v920 = vpow.pop %v919
      %v921 = vmul.f32 %v907, 1.442695
      %v922 = vpow.pop %v921
      %v923 = vmul.f32 %v908, 1.442695
      %v924 = vpow.pop %v923
      %v925 = vadd.f32 %v910, 1.0
      %v926 = vadd.f32 %v912, 1.0
      %v927 = vadd.f32 %v914, 1.0
      %v928 = vadd.f32 %v916, 1.0
      %v929 = vadd.f32 %v918, 1.0
      %v930 = vadd.f32 %v920, 1.0
      %v931 = vadd.f32 %v922, 1.0
      %v932 = vadd.f32 %v924, 1.0
      %v933 = vrcp.pop %v925
      %v934 = vmul.f32 1.0, %v933
      %v935 = vrcp.pop %v926
      %v936 = vmul.f32 1.0, %v935
      %v937 = vrcp.pop %v927
      %v938 = vmul.f32 1.0, %v937
      %v939 = vrcp.pop %v928
      %v940 = vmul.f32 1.0, %v939
      %v941 = vrcp.pop %v929
      %v942 = vmul.f32 1.0, %v941
      %v943 = vrcp.pop %v930
      %v944 = vmul.f32 1.0, %v943
      %v945 = vrcp.pop %v931
      %v946 = vmul.f32 1.0, %v945
      %v947 = vrcp.pop %v932
      %v948 = vmul.f32 1.0, %v947
      %v949 = vld [vmem:[#allocation2] sm:$0xff]
      %v950 = vld [vmem:[#allocation2 + $0x8] sm:$0xff]
      %v951 = vld [vmem:[#allocation2 + $0x10] sm:$0xff]
      %v952 = vld [vmem:[#allocation2 + $0x18] sm:$0xff]
      %v953 = vld [vmem:[#allocation2 + $0x20] sm:$0xff]
      %v954 = vld [vmem:[#allocation2 + $0x28] sm:$0xff]
      %v955 = vld [vmem:[#allocation2 + $0x30] sm:$0xff]
      %v956 = vld [vmem:[#allocation2 + $0x38] sm:$0xff]
      %v957 = vsub.f32 %v949, %v893
      %v958 = vsub.f32 %v950, %v894
      %v959 = vsub.f32 %v951, %v895
      %v960 = vsub.f32 %v952, %v896
      %v961 = vsub.f32 %v953, %v897
      %v962 = vsub.f32 %v954, %v898
      %v963 = vsub.f32 %v955, %v899
      %v964 = vsub.f32 %v956, %v900
      %v965 = vmul.f32 %v934, %v957
      %v966 = vmul.f32 %v936, %v958
      %v967 = vmul.f32 %v938, %v959
      %v968 = vmul.f32 %v940, %v960
      %v969 = vmul.f32 %v942, %v961
      %v970 = vmul.f32 %v944, %v962
      %v971 = vmul.f32 %v946, %v963
      %v972 = vmul.f32 %v948, %v964
      %v973 = vadd.f32 %v893, %v965
      %v974 = vadd.f32 %v894, %v966
      %v975 = vadd.f32 %v895, %v967
      %v976 = vadd.f32 %v896, %v968
      %v977 = vadd.f32 %v897, %v969
      %v978 = vadd.f32 %v898, %v970
      %v979 = vadd.f32 %v899, %v971
      %v980 = vadd.f32 %v900, %v972
      %981 = vst [vmem:[#allocation2] sm:$0xff] %v973
      %982 = vst [vmem:[#allocation2 + $0x8] sm:$0xff] %v974
      %983 = vst [vmem:[#allocation2 + $0x10] sm:$0xff] %v975
      %984 = vst [vmem:[#allocation2 + $0x18] sm:$0xff] %v976
      %985 = vst [vmem:[#allocation2 + $0x20] sm:$0xff] %v977
      %986 = vst [vmem:[#allocation2 + $0x28] sm:$0xff] %v978
      %987 = vst [vmem:[#allocation2 + $0x30] sm:$0xff] %v979
      %988 = vst [vmem:[#allocation2 + $0x38] sm:$0xff] %v980
      %989 = vst [vmem:[%s369] sm:$0xff] %v973
      %990 = vst [vmem:[%s369 + $0x8] sm:$0xff] %v974
      %991 = vst [vmem:[%s369 + $0x10] sm:$0xff] %v975
      %992 = vst [vmem:[%s369 + $0x18] sm:$0xff] %v976
      %993 = vst [vmem:[%s369 + $0x20] sm:$0xff] %v977
      %994 = vst [vmem:[%s369 + $0x28] sm:$0xff] %v978
      %995 = vst [vmem:[%s369 + $0x30] sm:$0xff] %v979
      %996 = vst [vmem:[%s369 + $0x38] sm:$0xff] %v980
      %p997 = scmp.lt.s32.totalorder %s21, 1
      %s998 = scalar_select %p997, %s21, 1
      %p999 = scmp.lt.s32.totalorder %s22, 7
      %s1000 = scalar_select %p999, %s22, 7
      %s1001 = smul.addr %s1000, 8
      %s1002 = smul.addr %s998, 64
      %s1003 = sadd.s32 %s1001, %s1002
      %s1004 = smul.addr %s1003, 8
      %s1005 = scalar_lea.vmem %s6, %s1004
      // Predicated region
      $region49: #{qrnn3d_layer_forward.1} parent=43 // pred_check
        %p1006 = pneg %p200
      $region50: #{qrnn3d_layer_forward.1} parent=43 // pred_check_branch
        %1008 = sbr.rel (%p1006) target = $region52
      $region51: #{qrnn3d_layer_forward.1} parent=43 // pred_region
        _
      $region52: #{qrnn3d_layer_forward.1} parent=43 // pred_fallthru
        _
    $region44: #{qrnn3d_layer_forward.1} parent=5 // pred_fallthru
      _
    %p1009 = scmp.le.s32.totalorder 2, %s12
    // Predicated region
    $region53: #{qrnn3d_layer_forward.1} parent=5 // pred_check
      %p1010 = pneg %p1009
    $region54: #{qrnn3d_layer_forward.1} parent=5 // pred_check_branch
      %1012 = sbr.rel (%p1010) target = $region56
    $region55: #{qrnn3d_layer_forward.1} parent=5 // pred_region
      %s1013 = ssub.s32 %s12, 2
      // Predicated region
      $region57: #{qrnn3d_layer_forward.1} parent=55 // pred_check
        %p1014 = pneg %p206
      $region58: #{qrnn3d_layer_forward.1} parent=55 // pred_check_branch
        %1016 = sbr.rel (%p1014) target = $region60
      $region59: #{qrnn3d_layer_forward.1} parent=55 // pred_region
        %p1017 = scmp.lt.s32.totalorder %s23, 1
        %s1018 = scalar_select %p1017, %s23, 1
        %p1019 = scmp.lt.s32.totalorder %s24, 7
        %s1020 = scalar_select %p1019, %s24, 7
        %s1021 = smul.addr %s1020, 8
        %s1022 = smul.addr %s1018, 64
        %s1023 = sadd.s32 %s1021, %s1022
        %s1024 = smul.addr %s1023, 8
        %s1025 = scalar_lea.vmem %s6, %s1024
      $region60: #{qrnn3d_layer_forward.1} parent=55 // pred_fallthru
        _
    $region56: #{qrnn3d_layer_forward.1} parent=5 // pred_fallthru
      _
  $region6: #{qrnn3d_layer_forward.1} parent=0 // loop_footer
    %s16 = sadd.s32 1, %s12
  $region7: #{qrnn3d_layer_forward.1} parent=0 // loop_footer_branch
    %11 = sbr.rel target = $region3
  $region8: #{qrnn3d_layer_forward.1} parent=0 // loop_exit
    _

</llo_original>
